<compile_context>
chip_gen: v5e
topology: v5e:2x2
jax: 0.10.0
libtpu: 0.0.40
codegen_flags: <defaults>
</compile_context>

<pallas_src>
import math

import jax
import jax.numpy as jnp
from jax.experimental import pallas as pl
from jax.experimental.pallas import tpu as pltpu


def _round_up(x, m):
    return ((x + m - 1) // m) * m


# ----------------------------- Pallas kernel --------------------------------

def _atomwise_linear_kernel(x_ref, w_ref, o_ref):
    # x_ref: (TILE_N, D_IN)   w_ref: (D_IN, D_OUT)   o_ref: (TILE_N, D_OUT)
    o_ref[...] = jnp.dot(
        x_ref[...], w_ref[...], preferred_element_type=jnp.float32
    ).astype(o_ref.dtype)


def atomwise_linear(x, w_dense, *, tile_n=2048, out_dtype=None, prefer_xla_below=0):
    """out = x @ w_dense, tiled over the atom (row) axis only.

    Feature axes keep their natural width (no lane padding, no de-pad slice);
    only the row axis is tiled, with the partial boundary block handled by
    Pallas clipping. `x` is consumed in its own dtype (feed bf16 from the
    producer for the bf16 path); the small weight is cast to match. MXU
    accumulation is f32; output dtype defaults to x.dtype.

    In a real model set prefer_xla_below≈1024: below that, pallas_call fixed
    cost dominates and a single fused XLA dot is strictly faster.
    """
    n, d_in = x.shape
    d_in_w, d_out = w_dense.shape
    assert d_in_w == d_in, "weight / feature dim mismatch"

    if out_dtype is None:
        out_dtype = x.dtype

    # Weight is tiny (d_in x d_out): casting it is negligible, and a constant
    # index_map keeps it VMEM-resident across all grid steps.
    w = w_dense.astype(x.dtype)

    if n < 8 or n < prefer_xla_below:
        return jnp.dot(x, w, preferred_element_type=jnp.float32).astype(out_dtype)

    # Row tile: multiple of 8 sublanes, and no larger than floor(n/8)*8 so every
    # block *start* is in-bounds (only the last block overhangs and is clipped).
    # This also guarantees >=2 grid steps whenever n is not itself a tile.
    tile_n = max(8, min(_round_up(tile_n, 8), (n // 8) * 8))
    grid = (pl.cdiv(n, tile_n),)

    itemsize_x = jnp.dtype(x.dtype).itemsize
    itemsize_o = jnp.dtype(out_dtype).itemsize
    itemsize_w = jnp.dtype(w.dtype).itemsize

    # Double-buffered x / out tiles + resident weight. Only raise the scoped
    # VMEM limit when it would actually be exceeded; cap at 40 MiB so it stays
    # comfortably under v7x's 64 MiB physical VMEM (fine on v5e/v6e too).
    vmem_need = (2 * tile_n * d_in * itemsize_x
                 + 2 * tile_n * d_out * itemsize_o
                 + 2 * d_in * d_out * itemsize_w)
    vmem_limit = None
    if vmem_need > (12 << 20):
        vmem_limit = int(min(vmem_need + (4 << 20), 40 << 20))

    cost = pl.CostEstimate(
        flops=2 * n * d_in * d_out,
        transcendentals=0,
        bytes_accessed=(n * d_in * itemsize_x
                        + d_in * d_out * itemsize_w
                        + n * d_out * itemsize_o),
    )

    return pl.pallas_call(
        _atomwise_linear_kernel,
        out_shape=jax.ShapeDtypeStruct((n, d_out), out_dtype),
        grid_spec=pltpu.PrefetchScalarGridSpec(
            num_scalar_prefetch=0,
            grid=grid,
            in_specs=[
                # Natural feature width: last block dim equals the full array
                # dim, so no 40->128 inflation of the dominant x stream.
                pl.BlockSpec((tile_n, d_in), lambda i: (i, 0)),
                # Constant index_map: weight fetched once, VMEM-resident.
                pl.BlockSpec((d_in, d_out), lambda i: (0, 0)),
            ],
            out_specs=pl.BlockSpec((tile_n, d_out), lambda i: (i, 0)),
        ),
        compiler_params=pltpu.CompilerParams(
            dimension_semantics=("parallel",),
            vmem_limit_bytes=vmem_limit,
        ),
        cost_estimate=cost,
    )(x, w)


# ------------------------- e3nn-Linear glue (plain JAX) ----------------------

def build_dense_weight(irreps, per_irrep_weights):
    """Block-diagonal dense matrix equivalent to e3nn o3.Linear with
    irreps_in == irreps_out (the AtomwiseLinear default when irreps_out=None).

    irreps: list of (mul, l). per_irrep_weights: list of (mul, mul) arrays.
    """
    blocks = []
    for (mul, l), w in zip(irreps, per_irrep_weights):
        d = 2 * l + 1
        # e3nn normalization: 1/sqrt(fan_in) with fan_in = mul_in (single path)
        blocks.append(jnp.kron(w / math.sqrt(mul), jnp.eye(d, dtype=w.dtype)))
    total = sum(b.shape[0] for b in blocks)
    W = jnp.zeros((total, total), dtype=blocks[0].dtype)
    off = 0
    for b in blocks:
        d = b.shape[0]
        W = W.at[off:off + d, off:off + d].set(b)
        off += d
    return W


def reference_atomwise_linear(x, irreps, per_irrep_weights):
    """Pure-JAX reference: per-irrep channel mixing (e3nn Linear semantics)."""
    outs = []
    off = 0
    n = x.shape[0]
    for (mul, l), w in zip(irreps, per_irrep_weights):
        d = 2 * l + 1
        blk = x[:, off:off + mul * d].reshape(n, mul, d)
        out = jnp.einsum("nid,io->nod", blk, w) / math.sqrt(mul)
        outs.append(out.reshape(n, mul * d))
        off += mul * d
    return jnp.concatenate(outs, axis=-1)


# ---------------------------------- main -------------------------------------

if __name__ == "__main__":
    key = jax.random.PRNGKey(0)

    # irreps_in = irreps_out = "16x0e + 8x1o"  ->  feature dim = 16*1 + 8*3 = 40
    irreps = [(16, 0), (8, 1)]
    feat_dim = sum(mul * (2 * l + 1) for mul, l in irreps)

    k_x, k_w0, k_w1, k_x2 = jax.random.split(key, 4)

    # per-irrep weights (e3nn Linear stores a (mul_in, mul_out) weight per path)
    per_irrep_weights = [
        jax.random.normal(k_w0, (16, 16), dtype=jnp.float32),
        jax.random.normal(k_w1, (8, 8), dtype=jnp.float32),
    ]
    W_dense = build_dense_weight(irreps, per_irrep_weights)

    # ---- small demo: 60 atoms (not a multiple of 8 / tile) -------------------
    num_atoms = 60
    node_features = jax.random.normal(k_x, (num_atoms, feat_dim), dtype=jnp.float32)
    ref = reference_atomwise_linear(node_features, irreps, per_irrep_weights)

    out = jax.block_until_ready(atomwise_linear(node_features, W_dense))
    assert out.shape == (num_atoms, feat_dim)
    assert jnp.allclose(out, ref, atol=1e-5, rtol=1e-5), "f32 mismatch vs reference"

    # bf16 path: features arrive in bf16 from the "producer" (no wrapper cast);
    # weight is quantized to bf16 too, hence the loose tolerance.
    out_bf16 = jax.block_until_ready(
        atomwise_linear(node_features.astype(jnp.bfloat16), W_dense))
    assert out_bf16.dtype == jnp.bfloat16
    assert jnp.allclose(out_bf16.astype(jnp.float32), ref, atol=1e-1, rtol=1e-1), \
        "bf16 mismatch vs reference"

    # ---- multi-step grid + clipped partial last block (no wrapper pad/slice) --
    n_big = 3000  # tile_n=512 -> 6 grid steps, last block overhangs by 72 rows
    x_big = jax.random.normal(k_x2, (n_big, feat_dim), dtype=jnp.float32)
    ref_big = reference_atomwise_linear(x_big, irreps, per_irrep_weights)
    out_big = jax.block_until_ready(atomwise_linear(x_big, W_dense, tile_n=512))
    assert out_big.shape == (n_big, feat_dim)
    assert jnp.allclose(out_big, ref_big, atol=1e-5, rtol=1e-5), \
        "multi-step grid mismatch vs reference"

    # data[out_field] = out  (dict plumbing of the nn.Module is trivial glue)
    print("KERNEL_OK")
</pallas_src>

<mosaic_0001>
module attributes {stable_mosaic.version = 11 : i64} {
  func.func @_atomwise_linear_kernel(%arg0: i32, %arg1: memref<56x40xf32, #tpu.memory_space<vmem>>, %arg2: memref<40x40xf32, #tpu.memory_space<vmem>>, %arg3: memref<56x40xf32, #tpu.memory_space<vmem>>) attributes {dimension_semantics = [#tpu.dimension_semantics<parallel>], iteration_bounds = array<i64: 2>, scalar_prefetch = 0 : i64, scratch_operands = 0 : i64, tpu.core_type = #tpu.core_type<tc>, window_params = [{transform_indices = @transform_0, window_bounds = array<i64: 56, 40>}, {pipeline_mode = #tpu.pipeline_mode<synchronous>, transform_indices = @transform_1, window_bounds = array<i64: 40, 40>}, {transform_indices = @transform_2, window_bounds = array<i64: 56, 40>}]} {
    %c0 = arith.constant 0 : index
    %c0_0 = arith.constant 0 : index
    %0 = vector.load %arg1[%c0, %c0_0] : memref<56x40xf32, #tpu.memory_space<vmem>>, vector<56x40xf32>
    %c0_1 = arith.constant 0 : index
    %c0_2 = arith.constant 0 : index
    %1 = vector.load %arg2[%c0_1, %c0_2] : memref<40x40xf32, #tpu.memory_space<vmem>>, vector<40x40xf32>
    %cst = arith.constant dense<0.000000e+00> : vector<56x40xf32>
    %2 = tpu.matmul %0, %1, %cst {dimension_numbers = #tpu.dot_dimension_numbers<[1], [0], [0], [1], [0, 0, 1, 1], [], []>} : vector<56x40xf32>, vector<40x40xf32>, vector<56x40xf32> -> vector<56x40xf32>
    %c0_3 = arith.constant 0 : index
    %c0_4 = arith.constant 0 : index
    %3 = vector.load %arg3[%c0_3, %c0_4] : memref<56x40xf32, #tpu.memory_space<vmem>>, vector<56x40xf32>
    tpu.vector_store %arg3[%c0_3, %c0_4], %2 {strides = array<i32>} : memref<56x40xf32, #tpu.memory_space<vmem>>, vector<56x40xf32>,
    return
  }
  func.func @transform_0(%arg0: i32) -> (i32, i32) {
    %c0_i32 = arith.constant 0 : i32
    %c0_i32_0 = arith.constant 0 : i32
    return %arg0, %c0_i32 : i32, i32
  }
  func.func @transform_1(%arg0: i32) -> (i32, i32) {
    %c0_i32 = arith.constant 0 : i32
    %c0_i32_0 = arith.constant 0 : i32
    %c0_i32_1 = arith.constant 0 : i32
    return %c0_i32, %c0_i32_0 : i32, i32
  }
  func.func @transform_2(%arg0: i32) -> (i32, i32) {
    %c0_i32 = arith.constant 0 : i32
    %c0_i32_0 = arith.constant 0 : i32
    return %arg0, %c0_i32 : i32, i32
  }
}

</mosaic_0001>

<llo_original>
// kernel: tpu_custom_call.1
$region0: #{tpu_custom_call.1}
  #allocation0 [shape = 'u32[]', space=smem, size = 0x4, offset = 0x4, fixed_abs, tag = 'smem constant byte address 0x4 - core index']
  #allocation1 [shape = 'u32[72,128]{1,0:T(1,128)}', space=vmem, size = 0x9000, scoped, tag = 'internal scratch']
  %s0 = inlined_call_operand.vmem [shape: f32[60,40], index: 0, kind: input, shape index: {}]
  %s1 = inlined_call_operand.vmem [shape: f32[40,40], index: 1, kind: input, shape index: {}]
  %s2 = inlined_call_operand.vmem [shape: f32[60,40], index: 2, kind: output, shape index: {}]
  %s3 = sld [smem:[#allocation0]]
  $region89: #{tpu_custom_call.1} parent=0
    _
  %s5 = ssub.s32 1, %s3
  %s6 = scalar_select 0, %s5, %s3
  $region1: #{tpu_custom_call.1} parent=0
    #allocation2 [shape = 'u8[57344]{0}', space=vmem, size = 0xe000, scoped, tag = 'output window, operand 0']
    loop: start=0, step=1, limit=4
    $region2: #{tpu_custom_call.1} parent=1 // loop_pre_header
      _
    $region3: #{tpu_custom_call.1} parent=1 // loop_header
      %s8 = sphi 0, %s12
      %p9 = scmp.ge.s32.totalorder %s8, 4
      %s18 = sphi 0, %s20
      %s21 = sphi 0, %s18
      %s22 = sphi 0, %s21
      %s38 = sphi 0, %s22
      %s42 = sphi 0, %s42
      %s44 = sphi 0, %s42
      %s45 = sphi 0, %s44
      %s59 = sphi 0, %s45
      %s65 = sphi 0, %s67
      %s68 = sphi 0, %s65
      %s69 = sphi 0, %s68
      %s85 = sphi 0, %s69
    $region4: #{tpu_custom_call.1} parent=1 // loop_header_branch
      %11 = sbr.rel (%p9) target = $region8
    $region5: #{tpu_custom_call.1} parent=1 // loop_body
      %s13 = ssub.s32 %s8, 1
      %s14 = ssub.s32 %s8, 2
      %s15 = sadd.s32 %s8, 1
      %s16 = ssub.s32 %s8, %s15
      %p17 = scmp.eq.s32.totalorder %s16, 0
      %s19 = sadd.s32 %s18, 1
      %s20 = scalar_select %p17, %s18, %s19
      %p23 = pneg %p17
      %p24 = scmp.eq.s32.totalorder %s8, 1
      %p25 = por %p23, %p24
      %p26 = scmp.ne.s32.totalorder %s18, %s21
      %p27 = scmp.eq.s32.totalorder %s8, 0
      %p28 = por %p26, %p27
      %p29 = scmp.ne.s32.totalorder %s18, %s21
      %p30 = scmp.eq.s32.totalorder %s13, 1
      %p31 = por %p29, %p30
      %p32 = scmp.ne.s32.totalorder %s21, %s22
      %p33 = scmp.eq.s32.totalorder %s13, 0
      %p34 = por %p32, %p33
      %p35 = scmp.ne.s32.totalorder %s21, %s22
      %p36 = scmp.eq.s32.totalorder %s14, 1
      %p37 = por %p35, %p36
      %p39 = scmp.ne.s32.totalorder %s22, %s38
      %p40 = scmp.eq.s32.totalorder %s14, 0
      %p41 = por %p39, %p40
      %s43 = sadd.s32 %s42, 1
      %p46 = scmp.eq.s32.totalorder %s8, 1
      %p47 = scmp.ne.s32.totalorder %s42, %s44
      %p48 = scmp.eq.s32.totalorder %s8, 0
      %p49 = por %p47, %p48
      %p50 = scmp.ne.s32.totalorder %s42, %s44
      %p51 = scmp.eq.s32.totalorder %s13, 1
      %p52 = por %p50, %p51
      %p53 = scmp.ne.s32.totalorder %s44, %s45
      %p54 = scmp.eq.s32.totalorder %s13, 0
      %p55 = por %p53, %p54
      %p56 = scmp.ne.s32.totalorder %s44, %s45
      %p57 = scmp.eq.s32.totalorder %s14, 1
      %p58 = por %p56, %p57
      %p60 = scmp.ne.s32.totalorder %s45, %s59
      %p61 = scmp.eq.s32.totalorder %s14, 0
      %p62 = por %p60, %p61
      %s63 = ssub.s32 %s8, %s15
      %p64 = scmp.eq.s32.totalorder %s63, 0
      %s66 = sadd.s32 %s65, 1
      %s67 = scalar_select %p64, %s65, %s66
      %p70 = pneg %p64
      %p71 = scmp.eq.s32.totalorder %s8, 1
      %p72 = por %p70, %p71
      %p73 = scmp.ne.s32.totalorder %s65, %s68
      %p74 = scmp.eq.s32.totalorder %s8, 0
      %p75 = por %p73, %p74
      %p76 = scmp.ne.s32.totalorder %s65, %s68
      %p77 = scmp.eq.s32.totalorder %s13, 1
      %p78 = por %p76, %p77
      %p79 = scmp.ne.s32.totalorder %s68, %s69
      %p80 = scmp.eq.s32.totalorder %s13, 0
      %p81 = por %p79, %p80
      %p82 = scmp.ne.s32.totalorder %s68, %s69
      %p83 = scmp.eq.s32.totalorder %s14, 1
      %p84 = por %p82, %p83
      %p86 = scmp.ne.s32.totalorder %s69, %s85
      %p87 = scmp.eq.s32.totalorder %s14, 0
      %p88 = por %p86, %p87
      %p89 = scmp.le.s32.totalorder 1, %s8
      %p90 = scmp.lt.s32.totalorder %s8, 3
      %p91 = pnand %p89, %p90
      %p92 = pneg %p91
      // Predicated region
      $region9: #{tpu_custom_call.1} parent=5 // pred_check
        _
      $region10: #{tpu_custom_call.1} parent=5 // pred_check_branch
        %94 = sbr.rel (%p91) target = $region12
      $region11: #{tpu_custom_call.1} parent=5 // pred_region
        %s95 = ssub.s32 %s8, 1
        // Predicated region
        $region13: #{tpu_custom_call.1} parent=11 // pred_check
          %p96 = pneg %p55
        $region14: #{tpu_custom_call.1} parent=11 // pred_check_branch
          %98 = sbr.rel (%p96) target = $region16
        $region15: #{tpu_custom_call.1} parent=11 // pred_region
          _
        $region16: #{tpu_custom_call.1} parent=11 // pred_fallthru
          _
      $region12: #{tpu_custom_call.1} parent=5 // pred_fallthru
        _
      %p99 = scmp.lt.s32.totalorder %s8, 2
      // Predicated region
      $region17: #{tpu_custom_call.1} parent=5 // pred_check
        %p100 = pneg %p99
      $region18: #{tpu_custom_call.1} parent=5 // pred_check_branch
        %102 = sbr.rel (%p100) target = $region20
      $region19: #{tpu_custom_call.1} parent=5 // pred_region
        // Predicated region
        $region21: #{tpu_custom_call.1} parent=19 // pred_check
          %p103 = pneg %p28
        $region22: #{tpu_custom_call.1} parent=19 // pred_check_branch
          %105 = sbr.rel (%p103) target = $region24
        $region23: #{tpu_custom_call.1} parent=19 // pred_region
          %s106 = smul.u32 7, %s8
          %s107 = ssub.s32 8, %s106
          %p108 = scmp.lt.s32.totalorder %s107, 7
          %s109 = scalar_select %p108, %s107, 7
          %s110 = smul.u32 8, %s109
          %p111 = scmp.lt.s32.totalorder %s106, 7
          %s112 = scalar_select %p111, %s106, 7
          %s113 = smul.addr %s112, 8
          %s114 = scalar_lea.vmem %s0, %s113
          %s115 = smul.u32 7, %s8
          %s116 = ssub.s32 8, %s115
          %p117 = scmp.lt.s32.totalorder %s116, 7
          %s118 = scalar_select %p117, %s116, 7
          %s119 = smul.u32 8, %s118
        $region24: #{tpu_custom_call.1} parent=19 // pred_fallthru
          _
      $region20: #{tpu_custom_call.1} parent=5 // pred_fallthru
        _
      %p120 = scmp.le.s32.totalorder 1, %s8
      %p121 = scmp.lt.s32.totalorder %s8, 3
      %p122 = pnand %p120, %p121
      %p123 = pneg %p122
      // Predicated region
      $region25: #{tpu_custom_call.1} parent=5 // pred_check
        _
      $region26: #{tpu_custom_call.1} parent=5 // pred_check_branch
        %125 = sbr.rel (%p122) target = $region28
      $region27: #{tpu_custom_call.1} parent=5 // pred_region
        %s126 = ssub.s32 %s8, 1
        %s127 = smul.u32 7, %s13
        %s128 = ssub.s32 8, %s127
        %p129 = scmp.lt.s32.totalorder %s128, 7
        %s130 = scalar_select %p129, %s128, 7
        %s131 = smul.u32 8, %s130
        %p132 = scmp.lt.s32.totalorder %s127, 7
        %s133 = scalar_select %p132, %s127, 7
        %s134 = smul.addr %s133, 8
        %s135 = scalar_lea.vmem %s0, %s134
        %p136 = pneg %p34
        %p137 = pneg %p31
        %p138 = pneg %p55
        %p139 = pneg %p52
        %p140 = pneg %p81
        %p141 = pneg %p78
        %s142 = sand.u32 %s68, 1
        %s143 = sand.u32 %s68, 1
        %s144 = smul.addr %s143, 56
        %s145 = scalar_lea.vmem [#allocation2], %s144
        %s146 = smul.u32 7, %s13
        %s147 = ssub.s32 8, %s146
        %p148 = scmp.lt.s32.totalorder %s147, 7
        %s149 = scalar_select %p148, %s147, 7
        %s150 = smul.u32 8, %s149
        %p151 = scmp.lt.s32.totalorder %s146, 7
        %s152 = scalar_select %p151, %s146, 7
        %s153 = smul.addr %s152, 8
        %s154 = scalar_lea.vmem %s0, %s153
        %s155 = smul.u32 7, %s13
        %s156 = ssub.s32 8, %s155
        %p157 = scmp.lt.s32.totalorder %s156, 7
        %s158 = scalar_select %p157, %s156, 7
        %s159 = smul.u32 8, %s158
        %s160 = smul.u32 7, %s13
        %s161 = ssub.s32 8, %s160
        %p162 = scmp.lt.s32.totalorder %s161, 7
        %s163 = scalar_select %p162, %s161, 7
        %s164 = smul.u32 8, %s163
        %v165 = vld [vmem:[%s154] sm:$0xff]
        %v166 = vld [vmem:[%s154 + $0x8] sm:$0xff]
        %v167 = vld [vmem:[%s154 + $0x10] sm:$0xff]
        %v168 = vld [vmem:[%s154 + $0x18] sm:$0xff]
        %v169 = vld [vmem:[%s154 + $0x20] sm:$0xff]
        %v170 = vld [vmem:[%s154 + $0x28] sm:$0xff]
        %v171 = vld [vmem:[%s154 + $0x30] sm:$0xff]
        %v172 = vld [vmem:[%s1] sm:$0xff]
        %v173 = vld [vmem:[%s1 + $0x8] sm:$0xff]
        %v174 = vld [vmem:[%s1 + $0x10] sm:$0xff]
        %v175 = vld [vmem:[%s1 + $0x18] sm:$0xff]
        %v176 = vld [vmem:[%s1 + $0x20] sm:$0xff]
        %vm177 = vcmask 326656
        %v179 = vsel %vm177, %v165, 0
        %v182 = vsel %vm177, %v166, 0
        %v185 = vsel %vm177, %v167, 0
        %v188 = vsel %vm177, %v168, 0
        %v191 = vsel %vm177, %v169, 0
        %v194 = vsel %vm177, %v170, 0
        %v197 = vsel %vm177, %v171, 0
        %199 = vmatpush.msra.mxu0 0.0
        %200 = vmatpush.msra.mxu0 0.0
        %201 = vmatpush.msra.mxu0 0.0
        %202 = vmatpush.msra.mxu0 0.0
        %203 = vmatpush.msra.mxu0 0.0
        %204 = vmatpush.msra.mxu0 0.0
        %205 = vmatpush.msra.mxu0 0.0
        %206 = vmatpush.msra.mxu0 0.0
        %207 = vmatpush.msra.mxu0 0.0
        %208 = vmatpush.msra.mxu0 0.0
        %209 = vmatpush.msra.mxu0 0.0
        %210 = vmatpush.msra.mxu0 %v176
        %211 = vmatpush.msra.mxu0 %v175
        %212 = vmatpush.msra.mxu0 %v174
        %213 = vmatpush.msra.mxu0 %v173
        %214 = vmatpush.msra.mxu0 %v172
        %215 = vmatmul.f32.gmra.mxu0 %v179
        %v216 = vpop.f32.mrf.mxu0
        %v217 = vadd.f32 0.0, %v216
        %218 = vmatmul.f32.gmra.mxu0 %v182
        %v219 = vpop.f32.mrf.mxu0
        %v220 = vadd.f32 0.0, %v219
        %221 = vmatmul.f32.gmra.mxu0 %v185
        %v222 = vpop.f32.mrf.mxu0
        %v223 = vadd.f32 0.0, %v222
        %224 = vmatmul.f32.gmra.mxu0 %v188
        %v225 = vpop.f32.mrf.mxu0
        %v226 = vadd.f32 0.0, %v225
        %227 = vmatmul.f32.gmra.mxu0 %v191
        %v228 = vpop.f32.mrf.mxu0
        %v229 = vadd.f32 0.0, %v228
        %230 = vmatmul.f32.gmra.mxu0 %v194
        %v231 = vpop.f32.mrf.mxu0
        %v232 = vadd.f32 0.0, %v231
        %233 = vmatmul.f32.gmra.mxu0 %v197
        %v234 = vpop.f32.mrf.mxu0
        %v235 = vadd.f32 0.0, %v234
        %236 = vdwg.mxu0
        %237 = vst.msk [vmem:[%s145] sm:$0xff] %vm177, %v217
        %238 = vst.msk [vmem:[%s145 + $0x8] sm:$0xff] %vm177, %v220
        %239 = vst.msk [vmem:[%s145 + $0x10] sm:$0xff] %vm177, %v223
        %240 = vst.msk [vmem:[%s145 + $0x18] sm:$0xff] %vm177, %v226
        %241 = vst.msk [vmem:[%s145 + $0x20] sm:$0xff] %vm177, %v229
        %242 = vst.msk [vmem:[%s145 + $0x28] sm:$0xff] %vm177, %v232
        %243 = vst.msk [vmem:[%s145 + $0x30] sm:$0xff] %vm177, %v235
        %s244 = sand.u32 %s68, 1
        %s245 = sand.u32 %s68, 1
        %s246 = smul.addr %s245, 56
        %s247 = scalar_lea.vmem [#allocation2], %s246
        // Predicated region
        $region29: #{tpu_custom_call.1} parent=27 // pred_check
          %p248 = pneg %p78
        $region30: #{tpu_custom_call.1} parent=27 // pred_check_branch
          %250 = sbr.rel (%p248) target = $region32
        $region31: #{tpu_custom_call.1} parent=27 // pred_region
          %s251 = smul.u32 7, %s13
          %s252 = ssub.s32 8, %s251
          %p253 = scmp.lt.s32.totalorder %s252, 7
          %s254 = scalar_select %p253, %s252, 7
          %s255 = smul.u32 8, %s254
          %p256 = scmp.ne.s32.totalorder 0, %s255
          %s257 = smul.addr %s251, 8
          %s258 = scalar_lea.vmem %s2, %s257
          // Predicated region
          $region33: #{tpu_custom_call.1} parent=31 // pred_check
            %p259 = pneg %p256
          $region34: #{tpu_custom_call.1} parent=31 // pred_check_branch
            %261 = sbr.rel (%p259) target = $region36
          $region35: #{tpu_custom_call.1} parent=31 // pred_region
            // Predicated region
            $region37: #{tpu_custom_call.1} parent=35 // pred_check
              _
            $region38: #{tpu_custom_call.1} parent=35 // pred_check_branch
              %263 = sbr.rel (0) target = $region40
            $region39: #{tpu_custom_call.1} parent=35 // pred_region
              // Predicated region
              $region59: #{tpu_custom_call.1} parent=39 // pred_check
                _
              $region60: #{tpu_custom_call.1} parent=39 // pred_check_branch
                %326 = sbr.rel (0) target = $region62
              $region61: #{tpu_custom_call.1} parent=39 // pred_region
                %s327 = sdiv.u32.pop %s254, 7
                %s328 = srem.u32.pop %s254, 7
                // While loop
                $region63: #{tpu_custom_call.1} parent=61 // loop_pre_header
                  _
                $region64: #{tpu_custom_call.1} parent=61 // loop_header
                  %s330 = sphi 0, %s332
                  %p331 = scmp.ge.s32.totalorder %s330, %s327
                  %s335 = sphi 0, %s354
                  %s336 = sphi %s247, %s357
                  %s337 = sphi %s258, %s358
                $region65: #{tpu_custom_call.1} parent=61 // loop_header_branch
                  %334 = sbr.rel (%p331) target = $region69
                $region66: #{tpu_custom_call.1} parent=61 // loop_body
                  %v338 = vld [vmem:[%s336] sm:$0xff]
                  %339 = vst [vmem:[%s337] sm:$0xff] %v338
                  %v340 = vld [vmem:[%s336 + $0x8] sm:$0xff]
                  %341 = vst [vmem:[%s337 + $0x8] sm:$0xff] %v340
                  %v342 = vld [vmem:[%s336 + $0x10] sm:$0xff]
                  %343 = vst [vmem:[%s337 + $0x10] sm:$0xff] %v342
                  %v344 = vld [vmem:[%s336 + $0x18] sm:$0xff]
                  %345 = vst [vmem:[%s337 + $0x18] sm:$0xff] %v344
                  %v346 = vld [vmem:[%s336 + $0x20] sm:$0xff]
                  %347 = vst [vmem:[%s337 + $0x20] sm:$0xff] %v346
                  %v348 = vld [vmem:[%s336 + $0x28] sm:$0xff]
                  %349 = vst [vmem:[%s337 + $0x28] sm:$0xff] %v348
                  %v350 = vld [vmem:[%s336 + $0x30] sm:$0xff]
                  %351 = vst [vmem:[%s337 + $0x30] sm:$0xff] %v350
                  %s352 = sadd.s32 1, %s335
                  %p353 = scmp.ge.s32.totalorder %s352, %s327
                  %s354 = scalar_select %p353, 0, %s352
                  %s355 = smul.u32 %s354, 56
                  %s356 = smul.u32 %s354, 56
                  %s357 = scalar_lea.vmem %s247, %s355 [#allocation2]
                  %s358 = scalar_lea.vmem %s258, %s356
                $region67: #{tpu_custom_call.1} parent=61 // loop_footer
                  %s332 = sadd.s32 %s330, 1
                $region68: #{tpu_custom_call.1} parent=61 // loop_footer_branch
                  %329 = sbr.rel target = $region64
                $region69: #{tpu_custom_call.1} parent=61 // loop_exit
                  _
                %s359 = sdiv.u32.pop %s254, 7
                %s360 = srem.u32.pop %s254, 7
                %s361 = smul.u32 %s359, 7
                %s362 = smul.u32 8, %s361
                %s363 = scalar_lea.vmem %s247, %s362 [#allocation2]
                %s364 = smul.u32 8, %s361
                %s365 = scalar_lea.vmem %s258, %s364
                // While loop
                $region70: #{tpu_custom_call.1} parent=61 // loop_pre_header
                  _
                $region71: #{tpu_custom_call.1} parent=61 // loop_header
                  %s367 = sphi 0, %s369
                  %p368 = scmp.ge.s32.totalorder %s367, %s360
                  %s372 = sphi 0, %s379
                  %s373 = sphi %s363, %s382
                  %s374 = sphi %s365, %s383
                $region72: #{tpu_custom_call.1} parent=61 // loop_header_branch
                  %371 = sbr.rel (%p368) target = $region76
                $region73: #{tpu_custom_call.1} parent=61 // loop_body
                  %v375 = vld [vmem:[%s373] sm:$0xff]
                  %376 = vst [vmem:[%s374] sm:$0xff] %v375
                  %s377 = sadd.s32 1, %s372
                  %p378 = scmp.ge.s32.totalorder %s377, %s360
                  %s379 = scalar_select %p378, 0, %s377
                  %s380 = smul.u32 %s379, 8
                  %s381 = smul.u32 %s379, 8
                  %s382 = scalar_lea.vmem %s363, %s380 [#allocation2]
                  %s383 = scalar_lea.vmem %s365, %s381
                $region74: #{tpu_custom_call.1} parent=61 // loop_footer
                  %s369 = sadd.s32 %s367, 1
                $region75: #{tpu_custom_call.1} parent=61 // loop_footer_branch
                  %366 = sbr.rel target = $region71
                $region76: #{tpu_custom_call.1} parent=61 // loop_exit
                  _
              $region62: #{tpu_custom_call.1} parent=39 // pred_fallthru
                _
              // Predicated region
              $region77: #{tpu_custom_call.1} parent=39 // pred_check
                _
              $region78: #{tpu_custom_call.1} parent=39 // pred_check_branch
                %385 = sbr.rel target = $region80
              $region79: #{tpu_custom_call.1} parent=39 // pred_region
                _
              $region80: #{tpu_custom_call.1} parent=39 // pred_fallthru
                _
            $region40: #{tpu_custom_call.1} parent=35 // pred_fallthru
              _
            // Predicated region
            $region41: #{tpu_custom_call.1} parent=35 // pred_check
              _
            $region42: #{tpu_custom_call.1} parent=35 // pred_check_branch
              %265 = sbr.rel target = $region44
            $region43: #{tpu_custom_call.1} parent=35 // pred_region
              %s267 = ssub.s32 256, 1
              %s268 = sdiv.u32.pop %s254, 7
              %s269 = srem.u32.pop %s254, 7
              // While loop
              $region45: #{tpu_custom_call.1} parent=43 // loop_pre_header
                _
              $region46: #{tpu_custom_call.1} parent=43 // loop_header
                %s271 = sphi 0, %s273
                %p272 = scmp.ge.s32.totalorder %s271, %s268
                %s276 = sphi 0, %s295
                %s277 = sphi %s247, %s298
                %s278 = sphi %s258, %s299
              $region47: #{tpu_custom_call.1} parent=43 // loop_header_branch
                %275 = sbr.rel (%p272) target = $region51
              $region48: #{tpu_custom_call.1} parent=43 // loop_body
                %v279 = vld [vmem:[%s277] sm:%s267]
                %280 = vst [vmem:[%s278] sm:%s267] %v279
                %v281 = vld [vmem:[%s277 + $0x8] sm:%s267]
                %282 = vst [vmem:[%s278 + $0x8] sm:%s267] %v281
                %v283 = vld [vmem:[%s277 + $0x10] sm:%s267]
                %284 = vst [vmem:[%s278 + $0x10] sm:%s267] %v283
                %v285 = vld [vmem:[%s277 + $0x18] sm:%s267]
                %286 = vst [vmem:[%s278 + $0x18] sm:%s267] %v285
                %v287 = vld [vmem:[%s277 + $0x20] sm:%s267]
                %288 = vst [vmem:[%s278 + $0x20] sm:%s267] %v287
                %v289 = vld [vmem:[%s277 + $0x28] sm:%s267]
                %290 = vst [vmem:[%s278 + $0x28] sm:%s267] %v289
                %v291 = vld [vmem:[%s277 + $0x30] sm:%s267]
                %292 = vst [vmem:[%s278 + $0x30] sm:%s267] %v291
                %s293 = sadd.s32 1, %s276
                %p294 = scmp.ge.s32.totalorder %s293, %s268
                %s295 = scalar_select %p294, 0, %s293
                %s296 = smul.u32 %s295, 56
                %s297 = smul.u32 %s295, 56
                %s298 = scalar_lea.vmem %s247, %s296 [#allocation2]
                %s299 = scalar_lea.vmem %s258, %s297
              $region49: #{tpu_custom_call.1} parent=43 // loop_footer
                %s273 = sadd.s32 %s271, 1
              $region50: #{tpu_custom_call.1} parent=43 // loop_footer_branch
                %270 = sbr.rel target = $region46
              $region51: #{tpu_custom_call.1} parent=43 // loop_exit
                _
              %s300 = sdiv.u32.pop %s254, 7
              %s301 = srem.u32.pop %s254, 7
              %s302 = smul.u32 %s300, 7
              %s303 = smul.u32 8, %s302
              %s304 = scalar_lea.vmem %s247, %s303 [#allocation2]
              %s305 = smul.u32 8, %s302
              %s306 = scalar_lea.vmem %s258, %s305
              // While loop
              $region52: #{tpu_custom_call.1} parent=43 // loop_pre_header
                _
              $region53: #{tpu_custom_call.1} parent=43 // loop_header
                %s308 = sphi 0, %s310
                %p309 = scmp.ge.s32.totalorder %s308, %s301
                %s313 = sphi 0, %s320
                %s314 = sphi %s304, %s323
                %s315 = sphi %s306, %s324
              $region54: #{tpu_custom_call.1} parent=43 // loop_header_branch
                %312 = sbr.rel (%p309) target = $region58
              $region55: #{tpu_custom_call.1} parent=43 // loop_body
                %v316 = vld [vmem:[%s314] sm:%s267]
                %317 = vst [vmem:[%s315] sm:%s267] %v316
                %s318 = sadd.s32 1, %s313
                %p319 = scmp.ge.s32.totalorder %s318, %s301
                %s320 = scalar_select %p319, 0, %s318
                %s321 = smul.u32 %s320, 8
                %s322 = smul.u32 %s320, 8
                %s323 = scalar_lea.vmem %s304, %s321 [#allocation2]
                %s324 = scalar_lea.vmem %s306, %s322
              $region56: #{tpu_custom_call.1} parent=43 // loop_footer
                %s310 = sadd.s32 %s308, 1
              $region57: #{tpu_custom_call.1} parent=43 // loop_footer_branch
                %307 = sbr.rel target = $region53
              $region58: #{tpu_custom_call.1} parent=43 // loop_exit
                _
            $region44: #{tpu_custom_call.1} parent=35 // pred_fallthru
              _
          $region36: #{tpu_custom_call.1} parent=31 // pred_fallthru
            _
          %386 = vnop
        $region32: #{tpu_custom_call.1} parent=27 // pred_fallthru
          _
      $region28: #{tpu_custom_call.1} parent=5 // pred_fallthru
        _
      %p387 = scmp.le.s32.totalorder 2, %s8
      // Predicated region
      $region81: #{tpu_custom_call.1} parent=5 // pred_check
        %p388 = pneg %p387
      $region82: #{tpu_custom_call.1} parent=5 // pred_check_branch
        %390 = sbr.rel (%p388) target = $region84
      $region83: #{tpu_custom_call.1} parent=5 // pred_region
        %s391 = ssub.s32 %s8, 2
        // Predicated region
        $region85: #{tpu_custom_call.1} parent=83 // pred_check
          %p392 = pneg %p84
        $region86: #{tpu_custom_call.1} parent=83 // pred_check_branch
          %394 = sbr.rel (%p392) target = $region88
        $region87: #{tpu_custom_call.1} parent=83 // pred_region
          %s395 = sand.u32 %s69, 1
          %s396 = sand.u32 %s69, 1
          %s397 = smul.addr %s396, 56
          %s398 = scalar_lea.vmem [#allocation2], %s397
        $region88: #{tpu_custom_call.1} parent=83 // pred_fallthru
          _
      $region84: #{tpu_custom_call.1} parent=5 // pred_fallthru
        _
    $region6: #{tpu_custom_call.1} parent=1 // loop_footer
      %s12 = sadd.s32 1, %s8
    $region7: #{tpu_custom_call.1} parent=1 // loop_footer_branch
      %7 = sbr.rel target = $region3
    $region8: #{tpu_custom_call.1} parent=1 // loop_exit
      _

</llo_original>
